<compile_context>
chip_gen: v5e
topology: v5e:2x2
jax: 0.10.0
libtpu: 0.0.40
codegen_flags: <defaults>
</compile_context>

<pallas_src>
import jax
import jax.numpy as jnp
from jax.experimental import pallas as pl
from jax.experimental.pallas import tpu as pltpu


def qnet_kernel(x_ref, w1_ref, b1_ref, w2_ref, b2_ref, w3_ref, b3_ref, o_ref):
    # In-kernel f32 -> bf16 cast (VPU work hidden under DMA).
    x = x_ref[...].astype(jnp.bfloat16)
    # Layer 1: (TB, 81) @ (81, 128) + (1, 128) -> ReLU   (bf16 in, f32 acc)
    h1 = jnp.dot(x, w1_ref[...], preferred_element_type=jnp.float32)
    h1 = jnp.maximum(h1 + b1_ref[...], 0.0)
    # Layer 2: (TB, 128) @ (128, 64) + (1, 64) -> ReLU
    h2 = jnp.dot(h1.astype(jnp.bfloat16), w2_ref[...],
                 preferred_element_type=jnp.float32)
    h2 = jnp.maximum(h2 + b2_ref[...], 0.0)
    # Layer 3 (lane-dense): (TB, 64) @ (64, 128) + (1, 128); cols 4..127 are 0.
    out = jnp.dot(h2.astype(jnp.bfloat16), w3_ref[...],
                  preferred_element_type=jnp.float32)
    # bf16 writeback: halves the dominant HBM stream.
    o_ref[...] = (out + b3_ref[...]).astype(o_ref.dtype)


def _round_up(n, m):
    return ((n + m - 1) // m) * m


def _pick_tile(B, tile_b):
    """Batch tile: big enough to amortize the ~0.35us/step overhead, small
    enough to keep >= ~8 grid steps for v7x megacore and to avoid gross
    padding at small B."""
    if B <= 256:
        # Single grid step; minimal padding (16 = bf16 sublane packing).
        return _round_up(B, 16)
    tb = min(tile_b, _round_up(B, 256))
    # Keep at least ~8 grid steps so ("parallel",) has work for both v7x TCs.
    cap = max(256, _round_up(pl.cdiv(B, 8), 256))
    tb = max(256, min(tb, cap))
    return tb


def qnet_forward(x, params, *, tile_b=2048):
    """x: (B, 81) float32/bfloat16.  Returns (B, 4) float32."""
    w1, b1, w2, b2, w3, b3 = params
    B = x.shape[0]

    tb = _pick_tile(B, tile_b)
    Bp = _round_up(B, tb)

    # No wrapper-side dtype conversion of x; only pad rows when needed.
    xin = x
    if Bp != B:
        xin = jnp.pad(xin, ((0, Bp - B), (0, 0)))

    # bf16 weights for the MXU; biases stay f32.
    w1b = w1.astype(jnp.bfloat16)
    w2b = w2.astype(jnp.bfloat16)
    # Lane-dense final layer: zero-pad to 128 output columns.
    n3 = w3.shape[1]
    w3p = jnp.pad(w3, ((0, 0), (0, 128 - n3))).astype(jnp.bfloat16)
    b3p = jnp.pad(b3, ((0, 0), (0, 128 - n3))).astype(jnp.float32)
    b1f = b1.astype(jnp.float32)
    b2f = b2.astype(jnp.float32)

    x_bytes_per_row = 81 * jnp.dtype(xin.dtype).itemsize
    flops = 2 * Bp * (81 * 128 + 128 * 64 + 64 * 128)
    bytes_accessed = (
        Bp * x_bytes_per_row                          # x (caller dtype)
        + (81 * 128 + 128 * 64 + 64 * 128) * 2        # weights (bf16, resident)
        + (128 + 64 + 128) * 4                        # biases (f32, resident)
        + Bp * 128 * 2                                # output (bf16, lane-dense)
    )

    out = pl.pallas_call(
        qnet_kernel,
        out_shape=jax.ShapeDtypeStruct((Bp, 128), jnp.bfloat16),
        grid=(Bp // tb,),
        in_specs=[
            pl.BlockSpec((tb, 81), lambda i: (i, 0)),     # x: streamed per tile
            pl.BlockSpec((81, 128), lambda i: (0, 0)),    # w1: resident
            pl.BlockSpec((1, 128), lambda i: (0, 0)),     # b1: resident
            pl.BlockSpec((128, 64), lambda i: (0, 0)),    # w2: resident
            pl.BlockSpec((1, 64), lambda i: (0, 0)),      # b2: resident
            pl.BlockSpec((64, 128), lambda i: (0, 0)),    # w3 (padded): resident
            pl.BlockSpec((1, 128), lambda i: (0, 0)),     # b3 (padded): resident
        ],
        out_specs=pl.BlockSpec((tb, 128), lambda i: (i, 0)),
        compiler_params=pltpu.CompilerParams(
            dimension_semantics=("parallel",),
            vmem_limit_bytes=48 * 1024 * 1024),
        cost_estimate=pl.CostEstimate(
            flops=flops, transcendentals=0, bytes_accessed=bytes_accessed),
    )(xin, w1b, b1f, w2b, b2f, w3p, b3p)

    return out[:B, :4].astype(jnp.float32)


def init_params(key):
    # Deterministic init mimicking PyTorch's default Linear init
    # (uniform in [-1/sqrt(fan_in), 1/sqrt(fan_in)]).
    def linear(key, fan_in, fan_out):
        kw, kb = jax.random.split(key)
        bound = 1.0 / jnp.sqrt(jnp.float32(fan_in))
        w = jax.random.uniform(kw, (fan_in, fan_out), jnp.float32, -bound, bound)
        b = jax.random.uniform(kb, (1, fan_out), jnp.float32, -bound, bound)
        return w, b

    k1, k2, k3 = jax.random.split(key, 3)
    w1, b1 = linear(k1, 81, 128)
    w2, b2 = linear(k2, 128, 64)
    w3, b3 = linear(k3, 64, 4)
    return (w1, b1, w2, b2, w3, b3)


def _reference(x, params):
    # Pure-JAX reference using the same bf16-rounded operands the kernel sees
    # (f32 accumulation, bf16 final store), so only accumulation-order
    # differences remain.
    w1, b1, w2, b2, w3, b3 = params
    bf = lambda a: a.astype(jnp.bfloat16).astype(jnp.float32)
    h = jnp.maximum(bf(x) @ bf(w1) + b1, 0.0)
    h = jnp.maximum(bf(h) @ bf(w2) + b2, 0.0)
    return bf(bf(h) @ bf(w3) + b3)


if __name__ == "__main__":
    key = jax.random.PRNGKey(0)
    pkey, xkey = jax.random.split(key)
    params = init_params(pkey)

    # Small primary test (single grid step, no padding: B % 16 == 0).
    B = 16
    x = jax.random.normal(xkey, (B, 81), jnp.float32)
    out = qnet_forward(x, params)
    jax.block_until_ready(out)
    assert out.shape == (B, 4)
    ref = _reference(x, params)
    assert jnp.allclose(out, ref, atol=5e-3, rtol=5e-3)
    # Loose check against the full-f32 forward (bf16 rounding only).
    w1, b1, w2, b2, w3, b3 = params
    ref32 = jnp.maximum(x @ w1 + b1, 0.0)
    ref32 = jnp.maximum(ref32 @ w2 + b2, 0.0)
    ref32 = ref32 @ w3 + b3
    assert jnp.allclose(out, ref32, atol=6e-2, rtol=6e-2)

    # Second test exercising the multi-step batch grid + row-padding path
    # (B=600 -> tb=256, Bp=768, 3 grid steps).
    B2 = 600
    x2 = jax.random.normal(jax.random.PRNGKey(1), (B2, 81), jnp.float32)
    out2 = qnet_forward(x2, params)
    jax.block_until_ready(out2)
    assert out2.shape == (B2, 4)
    assert jnp.allclose(out2, _reference(x2, params), atol=5e-3, rtol=5e-3)

    print("KERNEL_OK")
</pallas_src>

<mosaic_0001>
module attributes {stable_mosaic.version = 11 : i64} {
  func.func @qnet_kernel(%arg0: i32, %arg1: memref<16x81xf32, #tpu.memory_space<vmem>>, %arg2: memref<81x128xbf16, #tpu.memory_space<vmem>>, %arg3: memref<1x128xf32, #tpu.memory_space<vmem>>, %arg4: memref<128x64xbf16, #tpu.memory_space<vmem>>, %arg5: memref<1x64xf32, #tpu.memory_space<vmem>>, %arg6: memref<64x128xbf16, #tpu.memory_space<vmem>>, %arg7: memref<1x128xf32, #tpu.memory_space<vmem>>, %arg8: memref<16x128xbf16, #tpu.memory_space<vmem>>) attributes {dimension_semantics = [#tpu.dimension_semantics<parallel>], iteration_bounds = array<i64: 1>, scalar_prefetch = 0 : i64, scratch_operands = 0 : i64, tpu.core_type = #tpu.core_type<tc>, window_params = [{transform_indices = @transform_0, window_bounds = array<i64: 16, 81>}, {pipeline_mode = #tpu.pipeline_mode<synchronous>, transform_indices = @transform_1, window_bounds = array<i64: 81, 128>}, {pipeline_mode = #tpu.pipeline_mode<synchronous>, transform_indices = @transform_2, window_bounds = array<i64: 1, 128>}, {pipeline_mode = #tpu.pipeline_mode<synchronous>, transform_indices = @transform_3, window_bounds = array<i64: 128, 64>}, {pipeline_mode = #tpu.pipeline_mode<synchronous>, transform_indices = @transform_4, window_bounds = array<i64: 1, 64>}, {pipeline_mode = #tpu.pipeline_mode<synchronous>, transform_indices = @transform_5, window_bounds = array<i64: 64, 128>}, {pipeline_mode = #tpu.pipeline_mode<synchronous>, transform_indices = @transform_6, window_bounds = array<i64: 1, 128>}, {transform_indices = @transform_7, window_bounds = array<i64: 16, 128>}]} {
    %c0 = arith.constant 0 : index
    %c0_0 = arith.constant 0 : index
    %0 = vector.load %arg1[%c0, %c0_0] : memref<16x81xf32, #tpu.memory_space<vmem>>, vector<16x81xf32>
    %1 = arith.truncf %0 : vector<16x81xf32> to vector<16x81xbf16>
    %c0_1 = arith.constant 0 : index
    %c0_2 = arith.constant 0 : index
    %2 = vector.load %arg2[%c0_1, %c0_2] : memref<81x128xbf16, #tpu.memory_space<vmem>>, vector<81x128xbf16>
    %cst = arith.constant dense<0.000000e+00> : vector<16x128xf32>
    %3 = tpu.matmul %1, %2, %cst {dimension_numbers = #tpu.dot_dimension_numbers<[1], [0], [0], [1], [0, 0, 1, 1], [], []>} : vector<16x81xbf16>, vector<81x128xbf16>, vector<16x128xf32> -> vector<16x128xf32>
    %c0_3 = arith.constant 0 : index
    %c0_4 = arith.constant 0 : index
    %4 = vector.load %arg3[%c0_3, %c0_4] : memref<1x128xf32, #tpu.memory_space<vmem>>, vector<1x128xf32>
    %5 = vector.broadcast %4 : vector<1x128xf32> to vector<16x128xf32>
    %6 = arith.addf %3, %5 : vector<16x128xf32>
    %cst_5 = arith.constant 0.000000e+00 : f32
    %7 = vector.broadcast %cst_5 : f32 to vector<16x128xf32>
    %8 = arith.maximumf %6, %7 : vector<16x128xf32>
    %9 = arith.truncf %8 : vector<16x128xf32> to vector<16x128xbf16>
    %c0_6 = arith.constant 0 : index
    %c0_7 = arith.constant 0 : index
    %10 = vector.load %arg4[%c0_6, %c0_7] : memref<128x64xbf16, #tpu.memory_space<vmem>>, vector<128x64xbf16>
    %cst_8 = arith.constant dense<0.000000e+00> : vector<16x64xf32>
    %11 = tpu.matmul %9, %10, %cst_8 {dimension_numbers = #tpu.dot_dimension_numbers<[1], [0], [0], [1], [0, 0, 1, 1], [], []>} : vector<16x128xbf16>, vector<128x64xbf16>, vector<16x64xf32> -> vector<16x64xf32>
    %c0_9 = arith.constant 0 : index
    %c0_10 = arith.constant 0 : index
    %12 = vector.load %arg5[%c0_9, %c0_10] : memref<1x64xf32, #tpu.memory_space<vmem>>, vector<1x64xf32>
    %13 = vector.broadcast %12 : vector<1x64xf32> to vector<16x64xf32>
    %14 = arith.addf %11, %13 : vector<16x64xf32>
    %cst_11 = arith.constant 0.000000e+00 : f32
    %15 = vector.broadcast %cst_11 : f32 to vector<16x64xf32>
    %16 = arith.maximumf %14, %15 : vector<16x64xf32>
    %17 = arith.truncf %16 : vector<16x64xf32> to vector<16x64xbf16>
    %c0_12 = arith.constant 0 : index
    %c0_13 = arith.constant 0 : index
    %18 = vector.load %arg6[%c0_12, %c0_13] : memref<64x128xbf16, #tpu.memory_space<vmem>>, vector<64x128xbf16>
    %cst_14 = arith.constant dense<0.000000e+00> : vector<16x128xf32>
    %19 = tpu.matmul %17, %18, %cst_14 {dimension_numbers = #tpu.dot_dimension_numbers<[1], [0], [0], [1], [0, 0, 1, 1], [], []>} : vector<16x64xbf16>, vector<64x128xbf16>, vector<16x128xf32> -> vector<16x128xf32>
    %c0_15 = arith.constant 0 : index
    %c0_16 = arith.constant 0 : index
    %20 = vector.load %arg7[%c0_15, %c0_16] : memref<1x128xf32, #tpu.memory_space<vmem>>, vector<1x128xf32>
    %21 = vector.broadcast %20 : vector<1x128xf32> to vector<16x128xf32>
    %22 = arith.addf %19, %21 : vector<16x128xf32>
    %23 = arith.truncf %22 : vector<16x128xf32> to vector<16x128xbf16>
    %c0_17 = arith.constant 0 : index
    %c0_18 = arith.constant 0 : index
    %24 = vector.load %arg8[%c0_17, %c0_18] : memref<16x128xbf16, #tpu.memory_space<vmem>>, vector<16x128xbf16>
    tpu.vector_store %arg8[%c0_17, %c0_18], %23 {strides = array<i32>} : memref<16x128xbf16, #tpu.memory_space<vmem>>, vector<16x128xbf16>,
    return
  }
  func.func @transform_0(%arg0: i32) -> (i32, i32) {
    %c0_i32 = arith.constant 0 : i32
    %c0_i32_0 = arith.constant 0 : i32
    return %arg0, %c0_i32 : i32, i32
  }
  func.func @transform_1(%arg0: i32) -> (i32, i32) {
    %c0_i32 = arith.constant 0 : i32
    %c0_i32_0 = arith.constant 0 : i32
    %c0_i32_1 = arith.constant 0 : i32
    return %c0_i32, %c0_i32_0 : i32, i32
  }
  func.func @transform_2(%arg0: i32) -> (i32, i32) {
    %c0_i32 = arith.constant 0 : i32
    %c0_i32_0 = arith.constant 0 : i32
    %c0_i32_1 = arith.constant 0 : i32
    return %c0_i32, %c0_i32_0 : i32, i32
  }
  func.func @transform_3(%arg0: i32) -> (i32, i32) {
    %c0_i32 = arith.constant 0 : i32
    %c0_i32_0 = arith.constant 0 : i32
    %c0_i32_1 = arith.constant 0 : i32
    return %c0_i32, %c0_i32_0 : i32, i32
  }
  func.func @transform_4(%arg0: i32) -> (i32, i32) {
    %c0_i32 = arith.constant 0 : i32
    %c0_i32_0 = arith.constant 0 : i32
    %c0_i32_1 = arith.constant 0 : i32
    return %c0_i32, %c0_i32_0 : i32, i32
  }
  func.func @transform_5(%arg0: i32) -> (i32, i32) {
    %c0_i32 = arith.constant 0 : i32
    %c0_i32_0 = arith.constant 0 : i32
    %c0_i32_1 = arith.constant 0 : i32
    return %c0_i32, %c0_i32_0 : i32, i32
  }
  func.func @transform_6(%arg0: i32) -> (i32, i32) {
    %c0_i32 = arith.constant 0 : i32
    %c0_i32_0 = arith.constant 0 : i32
    %c0_i32_1 = arith.constant 0 : i32
    return %c0_i32, %c0_i32_0 : i32, i32
  }
  func.func @transform_7(%arg0: i32) -> (i32, i32) {
    %c0_i32 = arith.constant 0 : i32
    %c0_i32_0 = arith.constant 0 : i32
    return %arg0, %c0_i32 : i32, i32
  }
}

</mosaic_0001>

<llo_original>
// kernel: tpu_custom_call.1
$region0: #{tpu_custom_call.1}
  #allocation0 [shape = 'u32[]', space=smem, size = 0x4, offset = 0x4, fixed_abs, tag = 'smem constant byte address 0x4 - core index']
  #allocation1 [shape = 'u32[72,128]{1,0:T(1,128)}', space=vmem, size = 0x9000, scoped, tag = 'internal scratch']
  %s0 = inlined_call_operand.vmem [shape: f32[16,81], index: 0, kind: input, shape index: {}]
  %s1 = inlined_call_operand.vmem [shape: bf16[81,128], index: 1, kind: input, shape index: {}]
  %s2 = inlined_call_operand.vmem [shape: f32[1,128], index: 2, kind: input, shape index: {}]
  %s3 = inlined_call_operand.vmem [shape: bf16[128,64], index: 3, kind: input, shape index: {}]
  %s4 = inlined_call_operand.vmem [shape: f32[1,64], index: 4, kind: input, shape index: {}]
  %s5 = inlined_call_operand.vmem [shape: bf16[64,128], index: 5, kind: input, shape index: {}]
  %s6 = inlined_call_operand.vmem [shape: f32[1,128], index: 6, kind: input, shape index: {}]
  %s7 = inlined_call_operand.hbm [shape: bf16[16,128], index: 7, kind: output, shape index: {}]
  %s8 = sld [smem:[#allocation0]]
  $region38: #{tpu_custom_call.1} parent=0
    _
  %s10 = ssub.s32 1, %s8
  %s11 = scalar_select 0, %s10, %s8
  $region1: #{tpu_custom_call.1} parent=0
    #allocation2 [shape = 'u8[4096]{0}', space=vmem, size = 0x1000, scoped, tag = 'output window, operand 0, single buffered']
    #allocation3 [shape = 's32[1]{0}', space=sflag, size = 0x4, scoped, tag = 'scoped memory for tpu_custom_call.1']
    %12 = vsyncpa [#allocation3], 0
    // Predicated region
    $region2: #{tpu_custom_call.1} parent=1 // pred_check
      _
    $region3: #{tpu_custom_call.1} parent=1 // pred_check_branch
      %14 = sbr.rel (0) target = $region5
    $region4: #{tpu_custom_call.1} parent=1 // pred_region
      _
    $region5: #{tpu_custom_call.1} parent=1 // pred_fallthru
      _
    // Predicated region
    $region6: #{tpu_custom_call.1} parent=1 // pred_check
      _
    $region7: #{tpu_custom_call.1} parent=1 // pred_check_branch
      %16 = sbr.rel (0) target = $region9
    $region8: #{tpu_custom_call.1} parent=1 // pred_region
      _
    $region9: #{tpu_custom_call.1} parent=1 // pred_fallthru
      _
    // Predicated region
    $region10: #{tpu_custom_call.1} parent=1 // pred_check
      _
    $region11: #{tpu_custom_call.1} parent=1 // pred_check_branch
      %18 = sbr.rel (0) target = $region13
    $region12: #{tpu_custom_call.1} parent=1 // pred_region
      _
    $region13: #{tpu_custom_call.1} parent=1 // pred_fallthru
      _
    // Predicated region
    $region14: #{tpu_custom_call.1} parent=1 // pred_check
      _
    $region15: #{tpu_custom_call.1} parent=1 // pred_check_branch
      %20 = sbr.rel (0) target = $region17
    $region16: #{tpu_custom_call.1} parent=1 // pred_region
      _
    $region17: #{tpu_custom_call.1} parent=1 // pred_fallthru
      _
    // Predicated region
    $region18: #{tpu_custom_call.1} parent=1 // pred_check
      _
    $region19: #{tpu_custom_call.1} parent=1 // pred_check_branch
      %22 = sbr.rel (0) target = $region21
    $region20: #{tpu_custom_call.1} parent=1 // pred_region
      _
    $region21: #{tpu_custom_call.1} parent=1 // pred_fallthru
      _
    // Predicated region
    $region22: #{tpu_custom_call.1} parent=1 // pred_check
      _
    $region23: #{tpu_custom_call.1} parent=1 // pred_check_branch
      %24 = sbr.rel (0) target = $region25
    $region24: #{tpu_custom_call.1} parent=1 // pred_region
      _
    $region25: #{tpu_custom_call.1} parent=1 // pred_fallthru
      _
    // Predicated region
    $region26: #{tpu_custom_call.1} parent=1 // pred_check
      _
    $region27: #{tpu_custom_call.1} parent=1 // pred_check_branch
      %26 = sbr.rel (0) target = $region29
    $region28: #{tpu_custom_call.1} parent=1 // pred_region
      _
    $region29: #{tpu_custom_call.1} parent=1 // pred_fallthru
      _
    %v28 = vld [vmem:[%s0] sm:$0xff]
    %v29 = vld [vmem:[%s0 + $0x8] sm:$0xff]
    %v30 = vpack.c.bf16 %v29, %v28
    %v31 = vld [vmem:[%s1] sm:$0xf]
    %v32 = vld [vmem:[%s1 + $0x4] sm:$0xf]
    %v33 = vld [vmem:[%s1 + $0x8] sm:$0xf]
    %v34 = vld [vmem:[%s1 + $0xc] sm:$0xf]
    %v35 = vld [vmem:[%s1 + $0x10] sm:$0xf]
    %v36 = vld [vmem:[%s1 + $0x14] sm:$0xf]
    %v37 = vld [vmem:[%s1 + $0x18] sm:$0xf]
    %v38 = vld [vmem:[%s1 + $0x1c] sm:$0xf]
    %v39 = vld [vmem:[%s1 + $0x20] sm:$0xf]
    %v40 = vld [vmem:[%s1 + $0x24] sm:$0xf]
    %v41 = vld [vmem:[%s1 + $0x28] sm:$0x1]
    %v42 = vld [vmem:[%s2] sm:$0x1]
    %v44 = vperm.slane %v42, 0
    %v57 = vunpack.c.l.b16 %v31
    %v58 = vunpack.c.l.b16 %v32
    %v59 = vunpack.c.l.b16 %v33
    %v60 = vunpack.c.l.b16 %v34
    %v61 = vunpack.c.l.b16 %v35
    %v62 = vunpack.c.l.b16 %v36
    %v63 = vunpack.c.l.b16 %v37
    %v64 = vunpack.c.l.b16 %v38
    %v65 = vunpack.c.l.b16 %v39
    %v66 = vunpack.c.l.b16 %v40
    %v67 = vunpack.c.l.b16 %v41
    %v68 = vpack.c.b16 %v58, %v57
    %v69 = vpack.c.b16 %v60, %v59
    %v70 = vpack.c.b16 %v62, %v61
    %v71 = vpack.c.b16 %v64, %v63
    %v72 = vpack.c.b16 %v66, %v65
    %v73 = vpack.c.b16 %v67, %v67
    %vm79 = vcmask 662528
    %v81 = vsel %vm79, %v30, 0
    %vm83 = vcmask 1040384
    %v84 = vsel 0, 4294967295, 65535
    %v85 = vsel %vm83, %v84, 0
    %v87 = vand.u32 %v73, %v85
    %89 = vmatpush.bf16.msra.mxu0 0
    %90 = vmatpush.bf16.msra.mxu0 0
    %91 = vmatpush.bf16.msra.mxu0 %v87
    %92 = vmatpush.bf16.msra.mxu0 %v72
    %93 = vmatpush.bf16.msra.mxu0 %v71
    %94 = vmatpush.bf16.msra.mxu0 %v70
    %95 = vmatpush.bf16.msra.mxu0 %v69
    %96 = vmatpush.bf16.msra.mxu0 %v68
    %97 = vmatmul.bf16.gmra.mxu0 %v81
    %v98 = vpop.f32.mrf.mxu0
    %v99 = vadd.f32 %v44, %v98
    %v100 = vpop.f32.mrf.mxu0
    %v101 = vadd.f32 %v44, %v100
    %102 = vdwg.mxu0
    %v103 = vmax.f32 %v99, 0.0
    %v104 = vmax.f32 %v101, 0.0
    %v105 = vpack.c.bf16 %v104, %v103
    %v106 = vld [vmem:[%s3] sm:$0xf]
    %v107 = vld [vmem:[%s3 + $0x4] sm:$0xf]
    %v108 = vld [vmem:[%s3 + $0x8] sm:$0xf]
    %v109 = vld [vmem:[%s3 + $0xc] sm:$0xf]
    %v110 = vld [vmem:[%s3 + $0x10] sm:$0xf]
    %v111 = vld [vmem:[%s3 + $0x14] sm:$0xf]
    %v112 = vld [vmem:[%s3 + $0x18] sm:$0xf]
    %v113 = vld [vmem:[%s3 + $0x1c] sm:$0xf]
    %v114 = vld [vmem:[%s3 + $0x20] sm:$0xf]
    %v115 = vld [vmem:[%s3 + $0x24] sm:$0xf]
    %v116 = vld [vmem:[%s3 + $0x28] sm:$0xf]
    %v117 = vld [vmem:[%s3 + $0x2c] sm:$0xf]
    %v118 = vld [vmem:[%s3 + $0x30] sm:$0xf]
    %v119 = vld [vmem:[%s3 + $0x34] sm:$0xf]
    %v120 = vld [vmem:[%s3 + $0x38] sm:$0xf]
    %v121 = vld [vmem:[%s3 + $0x3c] sm:$0xf]
    %v122 = vld [vmem:[%s4] sm:$0x1]
    %v124 = vperm.slane %v122, 0
    %v142 = vunpack.c.l.b16 %v106
    %v143 = vunpack.c.l.b16 %v107
    %v144 = vunpack.c.l.b16 %v108
    %v145 = vunpack.c.l.b16 %v109
    %v146 = vunpack.c.l.b16 %v110
    %v147 = vunpack.c.l.b16 %v111
    %v148 = vunpack.c.l.b16 %v112
    %v149 = vunpack.c.l.b16 %v113
    %v150 = vunpack.c.l.b16 %v114
    %v151 = vunpack.c.l.b16 %v115
    %v152 = vunpack.c.l.b16 %v116
    %v153 = vunpack.c.l.b16 %v117
    %v154 = vunpack.c.l.b16 %v118
    %v155 = vunpack.c.l.b16 %v119
    %v156 = vunpack.c.l.b16 %v120
    %v157 = vunpack.c.l.b16 %v121
    %v158 = vpack.c.b16 %v143, %v142
    %v159 = vpack.c.b16 %v145, %v144
    %v160 = vpack.c.b16 %v147, %v146
    %v161 = vpack.c.b16 %v149, %v148
    %v162 = vpack.c.b16 %v151, %v150
    %v163 = vpack.c.b16 %v153, %v152
    %v164 = vpack.c.b16 %v155, %v154
    %v165 = vpack.c.b16 %v157, %v156
    %174 = vmatpush.bf16.msra.mxu0 %v165
    %175 = vmatpush.bf16.msra.mxu0 %v164
    %176 = vmatpush.bf16.msra.mxu0 %v163
    %177 = vmatpush.bf16.msra.mxu0 %v162
    %178 = vmatpush.bf16.msra.mxu0 %v161
    %179 = vmatpush.bf16.msra.mxu0 %v160
    %180 = vmatpush.bf16.msra.mxu0 %v159
    %181 = vmatpush.bf16.msra.mxu0 %v158
    %182 = vmatmul.bf16.gmra.mxu0 %v105
    %v183 = vpop.f32.mrf.mxu0
    %v184 = vadd.f32 %v124, %v183
    %v185 = vpop.f32.mrf.mxu0
    %v186 = vadd.f32 %v124, %v185
    %187 = vdwg.mxu0
    %v188 = vmax.f32 %v184, 0.0
    %v189 = vmax.f32 %v186, 0.0
    %v190 = vpack.c.bf16 %v189, %v188
    %v191 = vld [vmem:[%s5] sm:$0xf]
    %v192 = vld [vmem:[%s5 + $0x4] sm:$0xf]
    %v193 = vld [vmem:[%s5 + $0x8] sm:$0xf]
    %v194 = vld [vmem:[%s5 + $0xc] sm:$0xf]
    %v195 = vld [vmem:[%s5 + $0x10] sm:$0xf]
    %v196 = vld [vmem:[%s5 + $0x14] sm:$0xf]
    %v197 = vld [vmem:[%s5 + $0x18] sm:$0xf]
    %v198 = vld [vmem:[%s5 + $0x1c] sm:$0xf]
    %v199 = vld [vmem:[%s6] sm:$0x1]
    %v201 = vperm.slane %v199, 0
    %v211 = vunpack.c.l.b16 %v191
    %v212 = vunpack.c.l.b16 %v192
    %v213 = vunpack.c.l.b16 %v193
    %v214 = vunpack.c.l.b16 %v194
    %v215 = vunpack.c.l.b16 %v195
    %v216 = vunpack.c.l.b16 %v196
    %v217 = vunpack.c.l.b16 %v197
    %v218 = vunpack.c.l.b16 %v198
    %v219 = vpack.c.b16 %v212, %v211
    %v220 = vpack.c.b16 %v214, %v213
    %v221 = vpack.c.b16 %v216, %v215
    %v222 = vpack.c.b16 %v218, %v217
    %vm227 = vcmask 523264
    %v229 = vsel %vm227, %v190, 0
    %231 = vmatpush.bf16.msra.mxu0 0
    %232 = vmatpush.bf16.msra.mxu0 0
    %233 = vmatpush.bf16.msra.mxu0 0
    %234 = vmatpush.bf16.msra.mxu0 0
    %235 = vmatpush.bf16.msra.mxu0 %v222
    %236 = vmatpush.bf16.msra.mxu0 %v221
    %237 = vmatpush.bf16.msra.mxu0 %v220
    %238 = vmatpush.bf16.msra.mxu0 %v219
    %239 = vmatmul.bf16.gmra.mxu0 %v229
    %v240 = vpop.f32.mrf.mxu0
    %v241 = vadd.f32 %v201, %v240
    %v242 = vpop.f32.mrf.mxu0
    %v243 = vadd.f32 %v201, %v242
    %244 = vdwg.mxu0
    %v245 = vpack.c.bf16 %v241, %v241
    %v246 = vpack.c.bf16 %v243, %v243
    %247 = vst [vmem:[#allocation2] sm:$0xf] %v245
    %248 = vst [vmem:[#allocation2 + $0x4] sm:$0xf] %v246
    // Predicated region
    $region30: #{tpu_custom_call.1} parent=1 // pred_check
      _
    $region31: #{tpu_custom_call.1} parent=1 // pred_check_branch
      %250 = sbr.rel (0) target = $region33
    $region32: #{tpu_custom_call.1} parent=1 // pred_region
      %252 = vsyncadd [#allocation3], 0
      %s253 = sshll.u32 [#allocation2], 4
      %s254 = int_to_ptr.vmem [resolvable:$true] %s253
      %s255 = sshll.u32 %s7, 4
      %s256 = int_to_ptr.hbm [resolvable:$true] %s255
      %261 = dma.vmem_to_hbm [thread:$0]  %s254, 128, %s256, [#allocation3], 64, 64, 4
    $region33: #{tpu_custom_call.1} parent=1 // pred_fallthru
      _
    // Predicated region
    $region34: #{tpu_custom_call.1} parent=1 // pred_check
      _
    $region35: #{tpu_custom_call.1} parent=1 // pred_check_branch
      %263 = sbr.rel (0) target = $region37
    $region36: #{tpu_custom_call.1} parent=1 // pred_region
      %265 = dma.done [#allocation3], 128
    $region37: #{tpu_custom_call.1} parent=1 // pred_fallthru
      _
    %266 = vsyncpa [#allocation3], 1

</llo_original>
